<compile_context>
chip_gen: v5e
topology: v5e:2x2
jax: 0.10.0
libtpu: 0.0.40
codegen_flags: <defaults>
</compile_context>

<pallas_src>
import functools
import math

import jax
import jax.numpy as jnp
from jax.experimental import pallas as pl
from jax.experimental.pallas import tpu as pltpu


# ----------------------------------------------------------------------------
# Pallas kernel: one batch tile (bt, N, F) per grid step, everything fused:
#   pre-LayerNorm -> fused QK / V projections -> batched multi-head softmax
#   attention -> post-attn MLP -> residual add -> post-LayerNorm.
# ----------------------------------------------------------------------------
def _res_self_attn_kernel(
    x_ref,                                  # (bt, N, F)
    wqk_ref,                                # (F, 2E)  [Q(pre-scaled) | K]
    wv_ref,                                 # (F, E)
    wp_ref,                                 # (E, F)
    bqk_ref,                                # (1, 2E)
    bv_ref, bp_ref,                         # (1, E), (1, F)
    g_pre_ref, b_pre_ref,                   # (1, F), (1, F)
    g_post_ref, b_post_ref,                 # (1, F), (1, F)
    o_ref,                                  # (bt, N, F)
    *, bt, n, heads, ehr, embed_dim, eps):
  f = x_ref.shape[-1]
  m_rows = bt * n

  # Flatten batch tile into the sublane (row) axis: taller M for the MXU.
  x = x_ref[...].astype(jnp.float32).reshape(m_rows, f)

  # --- pre LayerNorm (PyTorch semantics: biased variance, eps, affine) ---
  mu = jnp.mean(x, axis=-1, keepdims=True)
  var = jnp.mean((x - mu) ** 2, axis=-1, keepdims=True)
  xn = (x - mu) * jax.lax.rsqrt(var + eps)
  xn = xn * g_pre_ref[...] + b_pre_ref[...]

  # --- projections: fused Q|K from the normalized input, V from the *raw*
  #     input (as in the PyTorch module). 1/logit_scale is pre-folded into the
  #     Q half of wqk/bqk, so no logit rescale is needed below. ---
  qk = jnp.dot(xn, wqk_ref[...], preferred_element_type=jnp.float32) + bqk_ref[...]
  v = jnp.dot(x, wv_ref[...], preferred_element_type=jnp.float32) + bv_ref[...]

  # Head split / merge: pure data movement (static lane slices + leading-axis
  # concat). All matmuls and the softmax below are single batched ops over the
  # bt*heads batch dimension.
  def split_heads(z2d, off):
    # (bt*n, >=off+E) -> (bt*heads, n, ehr)
    parts = [z2d[:, off + h * ehr: off + (h + 1) * ehr].reshape(bt, 1, n, ehr)
             for h in range(heads)]
    return jnp.concatenate(parts, axis=1).reshape(bt * heads, n, ehr)

  def merge_heads(z3d):
    # (bt*heads, n, ehr) -> (bt*n, E), lane index = h*ehr + e
    z4 = z3d.reshape(bt, heads, n, ehr)
    return jnp.concatenate([z4[:, h] for h in range(heads)],
                           axis=-1).reshape(m_rows, embed_dim)

  qh = split_heads(qk, 0)            # (bt*heads, n, ehr), already scaled
  kh = split_heads(qk, embed_dim)    # (bt*heads, n, ehr)
  vh = split_heads(v, 0)             # (bt*heads, n, ehr)

  # --- batched scaled dot-product attention over (batch*heads) ---
  logits = jnp.einsum('bqe,bke->bqk', qh, kh,
                      preferred_element_type=jnp.float32)   # (bt*H, n, n)
  mx = jnp.max(logits, axis=-1, keepdims=True)
  p = jnp.exp(logits - mx)
  p = p * pl.reciprocal(jnp.sum(p, axis=-1, keepdims=True), approx=True)
  att = jnp.einsum('bqk,bke->bqe', p, vh,
                   preferred_element_type=jnp.float32)       # (bt*H, n, ehr)
  att2 = merge_heads(att)                                    # (bt*n, E)

  # --- post-attention MLP + residual ---
  y = x + jnp.dot(att2, wp_ref[...], preferred_element_type=jnp.float32) + bp_ref[...]

  # --- post LayerNorm ---
  mu2 = jnp.mean(y, axis=-1, keepdims=True)
  var2 = jnp.mean((y - mu2) ** 2, axis=-1, keepdims=True)
  yn = (y - mu2) * jax.lax.rsqrt(var2 + eps)
  yn = yn * g_post_ref[...] + b_post_ref[...]

  o_ref[...] = yn.reshape(bt, n, f).astype(o_ref.dtype)


def residual_self_attention_cell(x, params, *, heads, embed_dim,
                                 max_pool_out=None, eps=1e-5,
                                 num_batch_blocks=2):
  """x: (B, N, F) float32. params: dict from init_params().

  num_batch_blocks: number of grid steps the batch is split into. Default 2
  keeps both v7x TensorCores busy; use 1 on single-TC v5e/v6e to fully fold
  the batch into a single invocation.
  """
  B, N, F = x.shape
  assert embed_dim % heads == 0
  ehr = embed_dim // heads

  # Choose batch tile: at most num_batch_blocks grid steps, evenly dividing B.
  nb = max(1, min(num_batch_blocks, B))
  while B % nb:
    nb -= 1
  bt = B // nb

  kernel = functools.partial(
      _res_self_attn_kernel,
      bt=bt, n=N, heads=heads, ehr=ehr, embed_dim=embed_dim, eps=eps)

  p = params
  full = lambda a: pl.BlockSpec(a.shape, lambda i: (0,) * a.ndim)

  out = pl.pallas_call(
      kernel,
      out_shape=jax.ShapeDtypeStruct((B, N, F), x.dtype),
      grid=(nb,),
      in_specs=[
          pl.BlockSpec((bt, N, F), lambda i: (i, 0, 0)),
          full(p["wqk"]), full(p["wv"]), full(p["wp"]),
          full(p["bqk"]), full(p["bv"]), full(p["bp"]),
          full(p["g_pre"]), full(p["b_pre"]),
          full(p["g_post"]), full(p["b_post"]),
      ],
      out_specs=pl.BlockSpec((bt, N, F), lambda i: (i, 0, 0)),
      compiler_params=pltpu.CompilerParams(
          dimension_semantics=("parallel",)),
  )(x, p["wqk"], p["wv"], p["wp"], p["bqk"], p["bv"], p["bp"],
    p["g_pre"], p["b_pre"], p["g_post"], p["b_post"])

  # Optional output pooling over the sequence axis (glue, not hot path).
  if max_pool_out is not None:
    out = jnp.max(out, axis=-2) if max_pool_out else jnp.mean(out, axis=-2)
  return out


# ----------------------------------------------------------------------------
# Deterministic parameter init mirroring the PyTorch __init__
# (xavier_normal_ with custom gain, zero biases, affine LayerNorm = 1/0).
# Q and K are packed into one (F, 2E) weight with 1/logit_scale folded into
# the Q half (and its bias half, were it nonzero).
# ----------------------------------------------------------------------------
def init_params(key, n_features, feature_size, heads, embed_dim,
                qk_w=0.125, v_w=0.125, post_w=0.125):
  qk_scale = math.sqrt(qk_w / feature_size)
  v_scale = math.sqrt(v_w / feature_size)
  post_scale = math.sqrt(post_w / embed_dim)
  logit_scale = math.sqrt(embed_dim / heads)
  ehr = embed_dim // heads

  def xavier(k, out_f, in_f, gain):
    std = gain * math.sqrt(2.0 / (in_f + out_f))
    return std * jax.random.normal(k, (out_f, in_f), jnp.float32)

  k1, k2, k3 = jax.random.split(key, 3)
  w_qk = xavier(k1, 2 * embed_dim, feature_size, qk_scale)    # (2E, F) torch layout
  w_v = xavier(k2, embed_dim, feature_size, v_scale)          # (E, F)
  w_post = xavier(k3, feature_size, embed_dim, post_scale)    # (F, E)

  # PyTorch reshapes qk output (2E,) -> (heads, ehr, 2); split rows the same way.
  w_qk_r = w_qk.reshape(heads, ehr, 2, feature_size)
  wq = w_qk_r[:, :, 0, :].reshape(embed_dim, feature_size).T  # (F, E)
  wk = w_qk_r[:, :, 1, :].reshape(embed_dim, feature_size).T  # (F, E)

  # Fuse Q|K and fold the 1/logit_scale logit normalization into the Q half.
  wqk_fused = jnp.concatenate([wq / logit_scale, wk], axis=1)  # (F, 2E)
  bqk_fused = jnp.zeros((1, 2 * embed_dim), jnp.float32)       # q-half would be /logit_scale

  params = dict(
      wqk=wqk_fused,
      wv=w_v.T, wp=w_post.T,
      bqk=bqk_fused,
      bv=jnp.zeros((1, embed_dim), jnp.float32),
      bp=jnp.zeros((1, feature_size), jnp.float32),
      g_pre=jnp.ones((1, feature_size), jnp.float32),
      b_pre=jnp.zeros((1, feature_size), jnp.float32),
      g_post=jnp.ones((1, feature_size), jnp.float32),
      b_post=jnp.zeros((1, feature_size), jnp.float32),
  )
  # Keep original torch-layout weights for the reference check.
  aux = dict(w_qk=w_qk, w_v=w_v, w_post=w_post)
  return params, aux


# Pure-JAX reference that follows the PyTorch forward literally (view/unbind/
# permute on the fused qk weight), used to validate the kernel.
def reference_forward(x, aux, heads, embed_dim, eps=1e-5):
  B, N, F = x.shape
  ehr = embed_dim // heads

  def ln(z):  # gamma=1, beta=0
    mu = z.mean(-1, keepdims=True)
    var = ((z - mu) ** 2).mean(-1, keepdims=True)
    return (z - mu) / jnp.sqrt(var + eps)

  xn = ln(x)
  qk = (xn @ aux["w_qk"].T).reshape(B, N, heads, ehr, 2)
  q = jnp.transpose(qk[..., 0], (0, 2, 1, 3))                 # (B,H,N,ehr)
  k = jnp.transpose(qk[..., 1], (0, 2, 3, 1))                 # (B,H,ehr,N)
  v = (x @ aux["w_v"].T).reshape(B, N, heads, ehr).transpose(0, 2, 1, 3)
  logit = jnp.einsum('bhqe,bhek->bhqk', q, k) / math.sqrt(embed_dim / heads)
  smax = jax.nn.softmax(logit, -1)
  att = jnp.einsum('bhqk,bhke->bhqe', smax, v).transpose(0, 2, 1, 3)
  att = att.reshape(B, N, embed_dim)
  y = x + att @ aux["w_post"].T
  return ln(y)


if __name__ == "__main__":
  # Small shapes consistent with the module: input_shape = (n_features, feature_size)
  B, N_FEATURES, FEATURE_SIZE = 2, 8, 32
  HEADS, EMBED_DIM = 4, 32

  key = jax.random.PRNGKey(0)
  k_x, k_p = jax.random.split(key)
  x = jax.random.normal(k_x, (B, N_FEATURES, FEATURE_SIZE), jnp.float32)

  params, aux = init_params(k_p, N_FEATURES, FEATURE_SIZE, HEADS, EMBED_DIM)

  out = residual_self_attention_cell(
      x, params, heads=HEADS, embed_dim=EMBED_DIM, max_pool_out=None)
  out = jax.block_until_ready(out)

  ref = reference_forward(x, aux, HEADS, EMBED_DIM)
  assert out.shape == (B, N_FEATURES, FEATURE_SIZE)
  # Tolerance accounts for the EUP approximate reciprocal in the softmax.
  assert jnp.allclose(out, ref, atol=2e-3, rtol=2e-3), "kernel/reference mismatch"

  print("KERNEL_OK")
</pallas_src>

<mosaic_0001>
module attributes {stable_mosaic.version = 11 : i64} {
  func.func @_res_self_attn_kernel(%arg0: i32, %arg1: memref<1x8x32xf32, #tpu.memory_space<vmem>>, %arg2: memref<32x64xf32, #tpu.memory_space<vmem>>, %arg3: memref<32x32xf32, #tpu.memory_space<vmem>>, %arg4: memref<32x32xf32, #tpu.memory_space<vmem>>, %arg5: memref<1x64xf32, #tpu.memory_space<vmem>>, %arg6: memref<1x32xf32, #tpu.memory_space<vmem>>, %arg7: memref<1x32xf32, #tpu.memory_space<vmem>>, %arg8: memref<1x32xf32, #tpu.memory_space<vmem>>, %arg9: memref<1x32xf32, #tpu.memory_space<vmem>>, %arg10: memref<1x32xf32, #tpu.memory_space<vmem>>, %arg11: memref<1x32xf32, #tpu.memory_space<vmem>>, %arg12: memref<1x8x32xf32, #tpu.memory_space<vmem>>) attributes {dimension_semantics = [#tpu.dimension_semantics<parallel>], iteration_bounds = array<i64: 2>, scalar_prefetch = 0 : i64, scratch_operands = 0 : i64, tpu.core_type = #tpu.core_type<tc>, window_params = [{transform_indices = @transform_0, window_bounds = array<i64: 1, 8, 32>}, {pipeline_mode = #tpu.pipeline_mode<synchronous>, transform_indices = @transform_1, window_bounds = array<i64: 32, 64>}, {pipeline_mode = #tpu.pipeline_mode<synchronous>, transform_indices = @transform_2, window_bounds = array<i64: 32, 32>}, {pipeline_mode = #tpu.pipeline_mode<synchronous>, transform_indices = @transform_3, window_bounds = array<i64: 32, 32>}, {pipeline_mode = #tpu.pipeline_mode<synchronous>, transform_indices = @transform_4, window_bounds = array<i64: 1, 64>}, {pipeline_mode = #tpu.pipeline_mode<synchronous>, transform_indices = @transform_5, window_bounds = array<i64: 1, 32>}, {pipeline_mode = #tpu.pipeline_mode<synchronous>, transform_indices = @transform_6, window_bounds = array<i64: 1, 32>}, {pipeline_mode = #tpu.pipeline_mode<synchronous>, transform_indices = @transform_7, window_bounds = array<i64: 1, 32>}, {pipeline_mode = #tpu.pipeline_mode<synchronous>, transform_indices = @transform_8, window_bounds = array<i64: 1, 32>}, {pipeline_mode = #tpu.pipeline_mode<synchronous>, transform_indices = @transform_9, window_bounds = array<i64: 1, 32>}, {pipeline_mode = #tpu.pipeline_mode<synchronous>, transform_indices = @transform_10, window_bounds = array<i64: 1, 32>}, {transform_indices = @transform_11, window_bounds = array<i64: 1, 8, 32>}]} {
    %c0 = arith.constant 0 : index
    %c0_0 = arith.constant 0 : index
    %c0_1 = arith.constant 0 : index
    %0 = vector.load %arg1[%c0, %c0_0, %c0_1] : memref<1x8x32xf32, #tpu.memory_space<vmem>>, vector<1x8x32xf32>
    %1 = vector.shape_cast %0 : vector<1x8x32xf32> to vector<8x32xf32>
    %cst = arith.constant dense<0.000000e+00> : vector<8xf32>
    %2 = vector.multi_reduction <add>, %1, %cst [1] : vector<8x32xf32> to vector<8xf32>
    %3 = vector.shape_cast %2 : vector<8xf32> to vector<8x1xf32>
    %cst_2 = arith.constant 3.200000e+01 : f32
    %4 = vector.broadcast %cst_2 : f32 to vector<8x1xf32>
    %5 = arith.divf %3, %4 : vector<8x1xf32>
    %6 = vector.broadcast %5 : vector<8x1xf32> to vector<8x32xf32>
    %7 = arith.subf %1, %6 : vector<8x32xf32>
    %8 = arith.mulf %7, %7 : vector<8x32xf32>
    %cst_3 = arith.constant dense<0.000000e+00> : vector<8xf32>
    %9 = vector.multi_reduction <add>, %8, %cst_3 [1] : vector<8x32xf32> to vector<8xf32>
    %10 = vector.shape_cast %9 : vector<8xf32> to vector<8x1xf32>
    %cst_4 = arith.constant 3.200000e+01 : f32
    %11 = vector.broadcast %cst_4 : f32 to vector<8x1xf32>
    %12 = arith.divf %10, %11 : vector<8x1xf32>
    %13 = vector.broadcast %5 : vector<8x1xf32> to vector<8x32xf32>
    %14 = arith.subf %1, %13 : vector<8x32xf32>
    %cst_5 = arith.constant 9.99999974E-6 : f32
    %15 = vector.broadcast %cst_5 : f32 to vector<8x1xf32>
    %16 = arith.addf %12, %15 : vector<8x1xf32>
    %17 = math.rsqrt %16 : vector<8x1xf32>
    %18 = vector.broadcast %17 : vector<8x1xf32> to vector<8x32xf32>
    %19 = arith.mulf %14, %18 : vector<8x32xf32>
    %c0_6 = arith.constant 0 : index
    %c0_7 = arith.constant 0 : index
    %20 = vector.load %arg8[%c0_6, %c0_7] : memref<1x32xf32, #tpu.memory_space<vmem>>, vector<1x32xf32>
    %21 = vector.broadcast %20 : vector<1x32xf32> to vector<8x32xf32>
    %22 = arith.mulf %19, %21 : vector<8x32xf32>
    %c0_8 = arith.constant 0 : index
    %c0_9 = arith.constant 0 : index
    %23 = vector.load %arg9[%c0_8, %c0_9] : memref<1x32xf32, #tpu.memory_space<vmem>>, vector<1x32xf32>
    %24 = vector.broadcast %23 : vector<1x32xf32> to vector<8x32xf32>
    %25 = arith.addf %22, %24 : vector<8x32xf32>
    %c0_10 = arith.constant 0 : index
    %c0_11 = arith.constant 0 : index
    %26 = vector.load %arg2[%c0_10, %c0_11] : memref<32x64xf32, #tpu.memory_space<vmem>>, vector<32x64xf32>
    %cst_12 = arith.constant dense<0.000000e+00> : vector<8x64xf32>
    %27 = tpu.matmul %25, %26, %cst_12 {dimension_numbers = #tpu.dot_dimension_numbers<[1], [0], [0], [1], [0, 0, 1, 1], [], []>} : vector<8x32xf32>, vector<32x64xf32>, vector<8x64xf32> -> vector<8x64xf32>
    %c0_13 = arith.constant 0 : index
    %c0_14 = arith.constant 0 : index
    %28 = vector.load %arg5[%c0_13, %c0_14] : memref<1x64xf32, #tpu.memory_space<vmem>>, vector<1x64xf32>
    %29 = vector.broadcast %28 : vector<1x64xf32> to vector<8x64xf32>
    %30 = arith.addf %27, %29 : vector<8x64xf32>
    %c0_15 = arith.constant 0 : index
    %c0_16 = arith.constant 0 : index
    %31 = vector.load %arg3[%c0_15, %c0_16] : memref<32x32xf32, #tpu.memory_space<vmem>>, vector<32x32xf32>
    %cst_17 = arith.constant dense<0.000000e+00> : vector<8x32xf32>
    %32 = tpu.matmul %1, %31, %cst_17 {dimension_numbers = #tpu.dot_dimension_numbers<[1], [0], [0], [1], [0, 0, 1, 1], [], []>} : vector<8x32xf32>, vector<32x32xf32>, vector<8x32xf32> -> vector<8x32xf32>
    %c0_18 = arith.constant 0 : index
    %c0_19 = arith.constant 0 : index
    %33 = vector.load %arg6[%c0_18, %c0_19] : memref<1x32xf32, #tpu.memory_space<vmem>>, vector<1x32xf32>
    %34 = vector.broadcast %33 : vector<1x32xf32> to vector<8x32xf32>
    %35 = arith.addf %32, %34 : vector<8x32xf32>
    %36 = vector.extract_strided_slice %30 {offsets = [0, 0], sizes = [8, 8], strides = [1, 1]} : vector<8x64xf32> to vector<8x8xf32>
    %37 = vector.shape_cast %36 : vector<8x8xf32> to vector<1x1x8x8xf32>
    %38 = vector.extract_strided_slice %30 {offsets = [0, 8], sizes = [8, 8], strides = [1, 1]} : vector<8x64xf32> to vector<8x8xf32>
    %39 = vector.shape_cast %38 : vector<8x8xf32> to vector<1x1x8x8xf32>
    %40 = vector.extract_strided_slice %30 {offsets = [0, 16], sizes = [8, 8], strides = [1, 1]} : vector<8x64xf32> to vector<8x8xf32>
    %41 = vector.shape_cast %40 : vector<8x8xf32> to vector<1x1x8x8xf32>
    %42 = vector.extract_strided_slice %30 {offsets = [0, 24], sizes = [8, 8], strides = [1, 1]} : vector<8x64xf32> to vector<8x8xf32>
    %43 = vector.shape_cast %42 : vector<8x8xf32> to vector<1x1x8x8xf32>
    %44 = tpu.concatenate %37, %39, %41, %43 in 1 : vector<1x1x8x8xf32>, vector<1x1x8x8xf32>, vector<1x1x8x8xf32>, vector<1x1x8x8xf32> -> vector<1x4x8x8xf32>
    %45 = vector.shape_cast %44 : vector<1x4x8x8xf32> to vector<4x8x8xf32>
    %46 = vector.extract_strided_slice %30 {offsets = [0, 32], sizes = [8, 8], strides = [1, 1]} : vector<8x64xf32> to vector<8x8xf32>
    %47 = vector.shape_cast %46 : vector<8x8xf32> to vector<1x1x8x8xf32>
    %48 = vector.extract_strided_slice %30 {offsets = [0, 40], sizes = [8, 8], strides = [1, 1]} : vector<8x64xf32> to vector<8x8xf32>
    %49 = vector.shape_cast %48 : vector<8x8xf32> to vector<1x1x8x8xf32>
    %50 = vector.extract_strided_slice %30 {offsets = [0, 48], sizes = [8, 8], strides = [1, 1]} : vector<8x64xf32> to vector<8x8xf32>
    %51 = vector.shape_cast %50 : vector<8x8xf32> to vector<1x1x8x8xf32>
    %52 = vector.extract_strided_slice %30 {offsets = [0, 56], sizes = [8, 8], strides = [1, 1]} : vector<8x64xf32> to vector<8x8xf32>
    %53 = vector.shape_cast %52 : vector<8x8xf32> to vector<1x1x8x8xf32>
    %54 = tpu.concatenate %47, %49, %51, %53 in 1 : vector<1x1x8x8xf32>, vector<1x1x8x8xf32>, vector<1x1x8x8xf32>, vector<1x1x8x8xf32> -> vector<1x4x8x8xf32>
    %55 = vector.shape_cast %54 : vector<1x4x8x8xf32> to vector<4x8x8xf32>
    %56 = vector.extract_strided_slice %35 {offsets = [0, 0], sizes = [8, 8], strides = [1, 1]} : vector<8x32xf32> to vector<8x8xf32>
    %57 = vector.shape_cast %56 : vector<8x8xf32> to vector<1x1x8x8xf32>
    %58 = vector.extract_strided_slice %35 {offsets = [0, 8], sizes = [8, 8], strides = [1, 1]} : vector<8x32xf32> to vector<8x8xf32>
    %59 = vector.shape_cast %58 : vector<8x8xf32> to vector<1x1x8x8xf32>
    %60 = vector.extract_strided_slice %35 {offsets = [0, 16], sizes = [8, 8], strides = [1, 1]} : vector<8x32xf32> to vector<8x8xf32>
    %61 = vector.shape_cast %60 : vector<8x8xf32> to vector<1x1x8x8xf32>
    %62 = vector.extract_strided_slice %35 {offsets = [0, 24], sizes = [8, 8], strides = [1, 1]} : vector<8x32xf32> to vector<8x8xf32>
    %63 = vector.shape_cast %62 : vector<8x8xf32> to vector<1x1x8x8xf32>
    %64 = tpu.concatenate %57, %59, %61, %63 in 1 : vector<1x1x8x8xf32>, vector<1x1x8x8xf32>, vector<1x1x8x8xf32>, vector<1x1x8x8xf32> -> vector<1x4x8x8xf32>
    %65 = vector.shape_cast %64 : vector<1x4x8x8xf32> to vector<4x8x8xf32>
    "tpu.trace_start"() <{level = 10 : i32, message = "bqe,bke->bqk"}> : () -> ()
    %cst_20 = arith.constant dense<0.000000e+00> : vector<4x8x8xf32>
    %66 = tpu.matmul %45, %55, %cst_20 {dimension_numbers = #tpu.dot_dimension_numbers<[2], [2], [1], [1], [0, 0, 0, 1, 1, 1], [0], [0]>} : vector<4x8x8xf32>, vector<4x8x8xf32>, vector<4x8x8xf32> -> vector<4x8x8xf32>
    "tpu.trace_stop"() : () -> ()
    %cst_21 = arith.constant dense<0xFF800000> : vector<4x8xf32>
    %67 = vector.multi_reduction <maximumf>, %66, %cst_21 [2] : vector<4x8x8xf32> to vector<4x8xf32>
    %68 = vector.shape_cast %67 : vector<4x8xf32> to vector<4x8x1xf32>
    %69 = vector.broadcast %68 : vector<4x8x1xf32> to vector<4x8x8xf32>
    %70 = arith.subf %66, %69 : vector<4x8x8xf32>
    %71 = math.exp %70 : vector<4x8x8xf32>
    %cst_22 = arith.constant dense<0.000000e+00> : vector<4x8xf32>
    %72 = vector.multi_reduction <add>, %71, %cst_22 [2] : vector<4x8x8xf32> to vector<4x8xf32>
    %73 = vector.shape_cast %72 : vector<4x8xf32> to vector<4x8x1xf32>
    %74 = tpu.reciprocal %73 {approx = true} : vector<4x8x1xf32> -> vector<4x8x1xf32>
    %75 = vector.broadcast %74 : vector<4x8x1xf32> to vector<4x8x8xf32>
    %76 = arith.mulf %71, %75 : vector<4x8x8xf32>
    "tpu.trace_start"() <{level = 10 : i32, message = "bqk,bke->bqe"}> : () -> ()
    %cst_23 = arith.constant dense<0.000000e+00> : vector<4x8x8xf32>
    %77 = tpu.matmul %76, %65, %cst_23 {dimension_numbers = #tpu.dot_dimension_numbers<[2], [1], [1], [2], [0, 0, 0, 1, 1, 2], [0], [0]>} : vector<4x8x8xf32>, vector<4x8x8xf32>, vector<4x8x8xf32> -> vector<4x8x8xf32>
    "tpu.trace_stop"() : () -> ()
    %78 = vector.shape_cast %77 : vector<4x8x8xf32> to vector<1x4x8x8xf32>
    %79 = vector.extract_strided_slice %78 {offsets = [0, 0, 0, 0], sizes = [1, 1, 8, 8], strides = [1, 1, 1, 1]} : vector<1x4x8x8xf32> to vector<1x1x8x8xf32>
    %80 = vector.shape_cast %79 : vector<1x1x8x8xf32> to vector<1x8x8xf32>
    %81 = vector.extract_strided_slice %78 {offsets = [0, 1, 0, 0], sizes = [1, 1, 8, 8], strides = [1, 1, 1, 1]} : vector<1x4x8x8xf32> to vector<1x1x8x8xf32>
    %82 = vector.shape_cast %81 : vector<1x1x8x8xf32> to vector<1x8x8xf32>
    %83 = vector.extract_strided_slice %78 {offsets = [0, 2, 0, 0], sizes = [1, 1, 8, 8], strides = [1, 1, 1, 1]} : vector<1x4x8x8xf32> to vector<1x1x8x8xf32>
    %84 = vector.shape_cast %83 : vector<1x1x8x8xf32> to vector<1x8x8xf32>
    %85 = vector.extract_strided_slice %78 {offsets = [0, 3, 0, 0], sizes = [1, 1, 8, 8], strides = [1, 1, 1, 1]} : vector<1x4x8x8xf32> to vector<1x1x8x8xf32>
    %86 = vector.shape_cast %85 : vector<1x1x8x8xf32> to vector<1x8x8xf32>
    %87 = tpu.concatenate %80, %82, %84, %86 in 2 : vector<1x8x8xf32>, vector<1x8x8xf32>, vector<1x8x8xf32>, vector<1x8x8xf32> -> vector<1x8x32xf32>
    %88 = vector.shape_cast %87 : vector<1x8x32xf32> to vector<8x32xf32>
    %c0_24 = arith.constant 0 : index
    %c0_25 = arith.constant 0 : index
    %89 = vector.load %arg4[%c0_24, %c0_25] : memref<32x32xf32, #tpu.memory_space<vmem>>, vector<32x32xf32>
    %cst_26 = arith.constant dense<0.000000e+00> : vector<8x32xf32>
    %90 = tpu.matmul %88, %89, %cst_26 {dimension_numbers = #tpu.dot_dimension_numbers<[1], [0], [0], [1], [0, 0, 1, 1], [], []>} : vector<8x32xf32>, vector<32x32xf32>, vector<8x32xf32> -> vector<8x32xf32>
    %91 = arith.addf %1, %90 : vector<8x32xf32>
    %c0_27 = arith.constant 0 : index
    %c0_28 = arith.constant 0 : index
    %92 = vector.load %arg7[%c0_27, %c0_28] : memref<1x32xf32, #tpu.memory_space<vmem>>, vector<1x32xf32>
    %93 = vector.broadcast %92 : vector<1x32xf32> to vector<8x32xf32>
    %94 = arith.addf %91, %93 : vector<8x32xf32>
    %cst_29 = arith.constant dense<0.000000e+00> : vector<8xf32>
    %95 = vector.multi_reduction <add>, %94, %cst_29 [1] : vector<8x32xf32> to vector<8xf32>
    %96 = vector.shape_cast %95 : vector<8xf32> to vector<8x1xf32>
    %cst_30 = arith.constant 3.200000e+01 : f32
    %97 = vector.broadcast %cst_30 : f32 to vector<8x1xf32>
    %98 = arith.divf %96, %97 : vector<8x1xf32>
    %99 = vector.broadcast %98 : vector<8x1xf32> to vector<8x32xf32>
    %100 = arith.subf %94, %99 : vector<8x32xf32>
    %101 = arith.mulf %100, %100 : vector<8x32xf32>
    %cst_31 = arith.constant dense<0.000000e+00> : vector<8xf32>
    %102 = vector.multi_reduction <add>, %101, %cst_31 [1] : vector<8x32xf32> to vector<8xf32>
    %103 = vector.shape_cast %102 : vector<8xf32> to vector<8x1xf32>
    %cst_32 = arith.constant 3.200000e+01 : f32
    %104 = vector.broadcast %cst_32 : f32 to vector<8x1xf32>
    %105 = arith.divf %103, %104 : vector<8x1xf32>
    %106 = vector.broadcast %98 : vector<8x1xf32> to vector<8x32xf32>
    %107 = arith.subf %94, %106 : vector<8x32xf32>
    %cst_33 = arith.constant 9.99999974E-6 : f32
    %108 = vector.broadcast %cst_33 : f32 to vector<8x1xf32>
    %109 = arith.addf %105, %108 : vector<8x1xf32>
    %110 = math.rsqrt %109 : vector<8x1xf32>
    %111 = vector.broadcast %110 : vector<8x1xf32> to vector<8x32xf32>
    %112 = arith.mulf %107, %111 : vector<8x32xf32>
    %c0_34 = arith.constant 0 : index
    %c0_35 = arith.constant 0 : index
    %113 = vector.load %arg10[%c0_34, %c0_35] : memref<1x32xf32, #tpu.memory_space<vmem>>, vector<1x32xf32>
    %114 = vector.broadcast %113 : vector<1x32xf32> to vector<8x32xf32>
    %115 = arith.mulf %112, %114 : vector<8x32xf32>
    %c0_36 = arith.constant 0 : index
    %c0_37 = arith.constant 0 : index
    %116 = vector.load %arg11[%c0_36, %c0_37] : memref<1x32xf32, #tpu.memory_space<vmem>>, vector<1x32xf32>
    %117 = vector.broadcast %116 : vector<1x32xf32> to vector<8x32xf32>
    %118 = arith.addf %115, %117 : vector<8x32xf32>
    %119 = vector.shape_cast %118 : vector<8x32xf32> to vector<1x8x32xf32>
    %c0_38 = arith.constant 0 : index
    %c0_39 = arith.constant 0 : index
    %c0_40 = arith.constant 0 : index
    %120 = vector.load %arg12[%c0_38, %c0_39, %c0_40] : memref<1x8x32xf32, #tpu.memory_space<vmem>>, vector<1x8x32xf32>
    tpu.vector_store %arg12[%c0_38, %c0_39, %c0_40], %119 {strides = array<i32>} : memref<1x8x32xf32, #tpu.memory_space<vmem>>, vector<1x8x32xf32>,
    return
  }
  func.func @transform_0(%arg0: i32) -> (i32, i32, i32) {
    %c0_i32 = arith.constant 0 : i32
    %c0_i32_0 = arith.constant 0 : i32
    %c0_i32_1 = arith.constant 0 : i32
    return %arg0, %c0_i32, %c0_i32_0 : i32, i32, i32
  }
  func.func @transform_1(%arg0: i32) -> (i32, i32) {
    %c0_i32 = arith.constant 0 : i32
    %c0_i32_0 = arith.constant 0 : i32
    %c0_i32_1 = arith.constant 0 : i32
    return %c0_i32, %c0_i32_0 : i32, i32
  }
  func.func @transform_2(%arg0: i32) -> (i32, i32) {
    %c0_i32 = arith.constant 0 : i32
    %c0_i32_0 = arith.constant 0 : i32
    %c0_i32_1 = arith.constant 0 : i32
    return %c0_i32, %c0_i32_0 : i32, i32
  }
  func.func @transform_3(%arg0: i32) -> (i32, i32) {
    %c0_i32 = arith.constant 0 : i32
    %c0_i32_0 = arith.constant 0 : i32
    %c0_i32_1 = arith.constant 0 : i32
    return %c0_i32, %c0_i32_0 : i32, i32
  }
  func.func @transform_4(%arg0: i32) -> (i32, i32) {
    %c0_i32 = arith.constant 0 : i32
    %c0_i32_0 = arith.constant 0 : i32
    %c0_i32_1 = arith.constant 0 : i32
    return %c0_i32, %c0_i32_0 : i32, i32
  }
  func.func @transform_5(%arg0: i32) -> (i32, i32) {
    %c0_i32 = arith.constant 0 : i32
    %c0_i32_0 = arith.constant 0 : i32
    %c0_i32_1 = arith.constant 0 : i32
    return %c0_i32, %c0_i32_0 : i32, i32
  }
  func.func @transform_6(%arg0: i32) -> (i32, i32) {
    %c0_i32 = arith.constant 0 : i32
    %c0_i32_0 = arith.constant 0 : i32
    %c0_i32_1 = arith.constant 0 : i32
    return %c0_i32, %c0_i32_0 : i32, i32
  }
  func.func @transform_7(%arg0: i32) -> (i32, i32) {
    %c0_i32 = arith.constant 0 : i32
    %c0_i32_0 = arith.constant 0 : i32
    %c0_i32_1 = arith.constant 0 : i32
    return %c0_i32, %c0_i32_0 : i32, i32
  }
  func.func @transform_8(%arg0: i32) -> (i32, i32) {
    %c0_i32 = arith.constant 0 : i32
    %c0_i32_0 = arith.constant 0 : i32
    %c0_i32_1 = arith.constant 0 : i32
    return %c0_i32, %c0_i32_0 : i32, i32
  }
  func.func @transform_9(%arg0: i32) -> (i32, i32) {
    %c0_i32 = arith.constant 0 : i32
    %c0_i32_0 = arith.constant 0 : i32
    %c0_i32_1 = arith.constant 0 : i32
    return %c0_i32, %c0_i32_0 : i32, i32
  }
  func.func @transform_10(%arg0: i32) -> (i32, i32) {
    %c0_i32 = arith.constant 0 : i32
    %c0_i32_0 = arith.constant 0 : i32
    %c0_i32_1 = arith.constant 0 : i32
    return %c0_i32, %c0_i32_0 : i32, i32
  }
  func.func @transform_11(%arg0: i32) -> (i32, i32, i32) {
    %c0_i32 = arith.constant 0 : i32
    %c0_i32_0 = arith.constant 0 : i32
    %c0_i32_1 = arith.constant 0 : i32
    return %arg0, %c0_i32, %c0_i32_0 : i32, i32, i32
  }
}

</mosaic_0001>

<llo_original>
// kernel: tpu_custom_call.1
$region0: #{tpu_custom_call.1}
  #allocation0 [shape = 'u32[]', space=smem, size = 0x4, offset = 0x4, fixed_abs, tag = 'smem constant byte address 0x4 - core index']
  #allocation1 [shape = 'u32[72,128]{1,0:T(1,128)}', space=vmem, size = 0x9000, scoped, tag = 'internal scratch']
  %s0 = inlined_call_operand.hbm [shape: f32[2,8,32], index: 0, kind: input, shape index: {}]
  %s1 = inlined_call_operand.hbm [shape: f32[32,64], index: 1, kind: input, shape index: {}]
  %s2 = inlined_call_operand.hbm [shape: f32[32,32], index: 2, kind: input, shape index: {}]
  %s3 = inlined_call_operand.hbm [shape: f32[32,32], index: 3, kind: input, shape index: {}]
  %s4 = inlined_call_operand.vmem [shape: f32[1,64], index: 4, kind: input, shape index: {}]
  %s5 = inlined_call_operand.vmem [shape: f32[1,32], index: 5, kind: input, shape index: {}]
  %s6 = inlined_call_operand.vmem [shape: f32[1,32], index: 6, kind: input, shape index: {}]
  %s7 = inlined_call_operand.vmem [shape: f32[1,32], index: 7, kind: input, shape index: {}]
  %s8 = inlined_call_operand.vmem [shape: f32[1,32], index: 8, kind: input, shape index: {}]
  %s9 = inlined_call_operand.vmem [shape: f32[1,32], index: 9, kind: input, shape index: {}]
  %s10 = inlined_call_operand.vmem [shape: f32[1,32], index: 10, kind: input, shape index: {}]
  %s11 = inlined_call_operand.hbm [shape: f32[2,8,32], index: 11, kind: output, shape index: {}]
  %s12 = sld [smem:[#allocation0]]
  $region93: #{tpu_custom_call.1} parent=0
    _
  %s14 = ssub.s32 1, %s12
  %s15 = scalar_select 0, %s14, %s12
  $region1: #{tpu_custom_call.1} parent=0
    #allocation2 [shape = 'u8[8192]{0}', space=vmem, size = 0x2000, scoped, tag = 'input window, operand 0']
    #allocation3 [shape = 's32[2]{0}', space=sflag, size = 0x8, scoped, tag = 'scoped memory for tpu_custom_call.1']
    #allocation4 [shape = 's32[2]{0}', space=sflag, size = 0x8, scoped, tag = 'scoped memory for tpu_custom_call.1']
    #allocation5 [shape = 'u8[16384]{0}', space=vmem, size = 0x4000, scoped, tag = 'input window, operand 1, single buffered']
    #allocation6 [shape = 's32[1]{0}', space=sflag, size = 0x4, scoped, tag = 'scoped memory for tpu_custom_call.1']
    #allocation7 [shape = 'u8[16384]{0}', space=vmem, size = 0x4000, scoped, tag = 'input window, operand 2, single buffered']
    #allocation8 [shape = 'u8[16384]{0}', space=vmem, size = 0x4000, scoped, tag = 'input window, operand 3, single buffered']
    #allocation9 [shape = 's32[1]{0}', space=sflag, size = 0x4, scoped, tag = 'scoped memory for tpu_custom_call.1']
    #allocation10 [shape = 'u8[8192]{0}', space=vmem, size = 0x2000, scoped, tag = 'output window, operand 0']
    %16 = vsyncpa [#allocation3], 0
    %s17 = scalar_lea.sflag [#allocation3], 1
    %18 = vsyncpa %s17, 0
    %19 = vsyncpa [#allocation6], 0
    %20 = vsyncpa [#allocation9], 0
    %21 = vsyncpa [#allocation4], 0
    %s22 = scalar_lea.sflag [#allocation4], 1
    %23 = vsyncpa %s22, 0
    loop: start=0, step=1, limit=4
    $region2: #{tpu_custom_call.1} parent=1 // loop_pre_header
      _
    $region3: #{tpu_custom_call.1} parent=1 // loop_header
      %s25 = sphi 0, %s29
      %p26 = scmp.ge.s32.totalorder %s25, 4
      %s35 = sphi 0, %s37
      %s38 = sphi 0, %s35
      %s39 = sphi 0, %s38
      %s55 = sphi 0, %s39
      %s59 = sphi 0, %s59
      %s61 = sphi 0, %s59
      %s62 = sphi 0, %s61
      %s76 = sphi 0, %s62
      %s80 = sphi 0, %s80
      %s82 = sphi 0, %s80
      %s83 = sphi 0, %s82
      %s97 = sphi 0, %s83
      %s101 = sphi 0, %s101
      %s103 = sphi 0, %s101
      %s104 = sphi 0, %s103
      %s118 = sphi 0, %s104
      %s122 = sphi 0, %s122
      %s124 = sphi 0, %s122
      %s125 = sphi 0, %s124
      %s139 = sphi 0, %s125
      %s143 = sphi 0, %s143
      %s145 = sphi 0, %s143
      %s146 = sphi 0, %s145
      %s160 = sphi 0, %s146
      %s164 = sphi 0, %s164
      %s166 = sphi 0, %s164
      %s167 = sphi 0, %s166
      %s181 = sphi 0, %s167
      %s185 = sphi 0, %s185
      %s187 = sphi 0, %s185
      %s188 = sphi 0, %s187
      %s202 = sphi 0, %s188
      %s206 = sphi 0, %s206
      %s208 = sphi 0, %s206
      %s209 = sphi 0, %s208
      %s223 = sphi 0, %s209
      %s227 = sphi 0, %s227
      %s229 = sphi 0, %s227
      %s230 = sphi 0, %s229
      %s244 = sphi 0, %s230
      %s248 = sphi 0, %s248
      %s250 = sphi 0, %s248
      %s251 = sphi 0, %s250
      %s265 = sphi 0, %s251
      %s271 = sphi 0, %s273
      %s274 = sphi 0, %s271
      %s275 = sphi 0, %s274
      %s291 = sphi 0, %s275
    $region4: #{tpu_custom_call.1} parent=1 // loop_header_branch
      %28 = sbr.rel (%p26) target = $region8
    $region5: #{tpu_custom_call.1} parent=1 // loop_body
      %s30 = ssub.s32 %s25, 1
      %s31 = ssub.s32 %s25, 2
      %s32 = sadd.s32 %s25, 1
      %s33 = ssub.s32 %s25, %s32
      %p34 = scmp.eq.s32.totalorder %s33, 0
      %s36 = sadd.s32 %s35, 1
      %s37 = scalar_select %p34, %s35, %s36
      %p40 = pneg %p34
      %p41 = scmp.eq.s32.totalorder %s25, 1
      %p42 = por %p40, %p41
      %p43 = scmp.ne.s32.totalorder %s35, %s38
      %p44 = scmp.eq.s32.totalorder %s25, 0
      %p45 = por %p43, %p44
      %p46 = scmp.ne.s32.totalorder %s35, %s38
      %p47 = scmp.eq.s32.totalorder %s30, 1
      %p48 = por %p46, %p47
      %p49 = scmp.ne.s32.totalorder %s38, %s39
      %p50 = scmp.eq.s32.totalorder %s30, 0
      %p51 = por %p49, %p50
      %p52 = scmp.ne.s32.totalorder %s38, %s39
      %p53 = scmp.eq.s32.totalorder %s31, 1
      %p54 = por %p52, %p53
      %p56 = scmp.ne.s32.totalorder %s39, %s55
      %p57 = scmp.eq.s32.totalorder %s31, 0
      %p58 = por %p56, %p57
      %s60 = sadd.s32 %s59, 1
      %p63 = scmp.eq.s32.totalorder %s25, 1
      %p64 = scmp.ne.s32.totalorder %s59, %s61
      %p65 = scmp.eq.s32.totalorder %s25, 0
      %p66 = por %p64, %p65
      %p67 = scmp.ne.s32.totalorder %s59, %s61
      %p68 = scmp.eq.s32.totalorder %s30, 1
      %p69 = por %p67, %p68
      %p70 = scmp.ne.s32.totalorder %s61, %s62
      %p71 = scmp.eq.s32.totalorder %s30, 0
      %p72 = por %p70, %p71
      %p73 = scmp.ne.s32.totalorder %s61, %s62
      %p74 = scmp.eq.s32.totalorder %s31, 1
      %p75 = por %p73, %p74
      %p77 = scmp.ne.s32.totalorder %s62, %s76
      %p78 = scmp.eq.s32.totalorder %s31, 0
      %p79 = por %p77, %p78
      %s81 = sadd.s32 %s80, 1
      %p84 = scmp.eq.s32.totalorder %s25, 1
      %p85 = scmp.ne.s32.totalorder %s80, %s82
      %p86 = scmp.eq.s32.totalorder %s25, 0
      %p87 = por %p85, %p86
      %p88 = scmp.ne.s32.totalorder %s80, %s82
      %p89 = scmp.eq.s32.totalorder %s30, 1
      %p90 = por %p88, %p89
      %p91 = scmp.ne.s32.totalorder %s82, %s83
      %p92 = scmp.eq.s32.totalorder %s30, 0
      %p93 = por %p91, %p92
      %p94 = scmp.ne.s32.totalorder %s82, %s83
      %p95 = scmp.eq.s32.totalorder %s31, 1
      %p96 = por %p94, %p95
      %p98 = scmp.ne.s32.totalorder %s83, %s97
      %p99 = scmp.eq.s32.totalorder %s31, 0
      %p100 = por %p98, %p99
      %s102 = sadd.s32 %s101, 1
      %p105 = scmp.eq.s32.totalorder %s25, 1
      %p106 = scmp.ne.s32.totalorder %s101, %s103
      %p107 = scmp.eq.s32.totalorder %s25, 0
      %p108 = por %p106, %p107
      %p109 = scmp.ne.s32.totalorder %s101, %s103
      %p110 = scmp.eq.s32.totalorder %s30, 1
      %p111 = por %p109, %p110
      %p112 = scmp.ne.s32.totalorder %s103, %s104
      %p113 = scmp.eq.s32.totalorder %s30, 0
      %p114 = por %p112, %p113
      %p115 = scmp.ne.s32.totalorder %s103, %s104
      %p116 = scmp.eq.s32.totalorder %s31, 1
      %p117 = por %p115, %p116
      %p119 = scmp.ne.s32.totalorder %s104, %s118
      %p120 = scmp.eq.s32.totalorder %s31, 0
      %p121 = por %p119, %p120
      %s123 = sadd.s32 %s122, 1
      %p126 = scmp.eq.s32.totalorder %s25, 1
      %p127 = scmp.ne.s32.totalorder %s122, %s124
      %p128 = scmp.eq.s32.totalorder %s25, 0
      %p129 = por %p127, %p128
      %p130 = scmp.ne.s32.totalorder %s122, %s124
      %p131 = scmp.eq.s32.totalorder %s30, 1
      %p132 = por %p130, %p131
      %p133 = scmp.ne.s32.totalorder %s124, %s125
      %p134 = scmp.eq.s32.totalorder %s30, 0
      %p135 = por %p133, %p134
      %p136 = scmp.ne.s32.totalorder %s124, %s125
      %p137 = scmp.eq.s32.totalorder %s31, 1
      %p138 = por %p136, %p137
      %p140 = scmp.ne.s32.totalorder %s125, %s139
      %p141 = scmp.eq.s32.totalorder %s31, 0
      %p142 = por %p140, %p141
      %s144 = sadd.s32 %s143, 1
      %p147 = scmp.eq.s32.totalorder %s25, 1
      %p148 = scmp.ne.s32.totalorder %s143, %s145
      %p149 = scmp.eq.s32.totalorder %s25, 0
      %p150 = por %p148, %p149
      %p151 = scmp.ne.s32.totalorder %s143, %s145
      %p152 = scmp.eq.s32.totalorder %s30, 1
      %p153 = por %p151, %p152
      %p154 = scmp.ne.s32.totalorder %s145, %s146
      %p155 = scmp.eq.s32.totalorder %s30, 0
      %p156 = por %p154, %p155
      %p157 = scmp.ne.s32.totalorder %s145, %s146
      %p158 = scmp.eq.s32.totalorder %s31, 1
      %p159 = por %p157, %p158
      %p161 = scmp.ne.s32.totalorder %s146, %s160
      %p162 = scmp.eq.s32.totalorder %s31, 0
      %p163 = por %p161, %p162
      %s165 = sadd.s32 %s164, 1
      %p168 = scmp.eq.s32.totalorder %s25, 1
      %p169 = scmp.ne.s32.totalorder %s164, %s166
      %p170 = scmp.eq.s32.totalorder %s25, 0
      %p171 = por %p169, %p170
      %p172 = scmp.ne.s32.totalorder %s164, %s166
      %p173 = scmp.eq.s32.totalorder %s30, 1
      %p174 = por %p172, %p173
      %p175 = scmp.ne.s32.totalorder %s166, %s167
      %p176 = scmp.eq.s32.totalorder %s30, 0
      %p177 = por %p175, %p176
      %p178 = scmp.ne.s32.totalorder %s166, %s167
      %p179 = scmp.eq.s32.totalorder %s31, 1
      %p180 = por %p178, %p179
      %p182 = scmp.ne.s32.totalorder %s167, %s181
      %p183 = scmp.eq.s32.totalorder %s31, 0
      %p184 = por %p182, %p183
      %s186 = sadd.s32 %s185, 1
      %p189 = scmp.eq.s32.totalorder %s25, 1
      %p190 = scmp.ne.s32.totalorder %s185, %s187
      %p191 = scmp.eq.s32.totalorder %s25, 0
      %p192 = por %p190, %p191
      %p193 = scmp.ne.s32.totalorder %s185, %s187
      %p194 = scmp.eq.s32.totalorder %s30, 1
      %p195 = por %p193, %p194
      %p196 = scmp.ne.s32.totalorder %s187, %s188
      %p197 = scmp.eq.s32.totalorder %s30, 0
      %p198 = por %p196, %p197
      %p199 = scmp.ne.s32.totalorder %s187, %s188
      %p200 = scmp.eq.s32.totalorder %s31, 1
      %p201 = por %p199, %p200
      %p203 = scmp.ne.s32.totalorder %s188, %s202
      %p204 = scmp.eq.s32.totalorder %s31, 0
      %p205 = por %p203, %p204
      %s207 = sadd.s32 %s206, 1
      %p210 = scmp.eq.s32.totalorder %s25, 1
      %p211 = scmp.ne.s32.totalorder %s206, %s208
      %p212 = scmp.eq.s32.totalorder %s25, 0
      %p213 = por %p211, %p212
      %p214 = scmp.ne.s32.totalorder %s206, %s208
      %p215 = scmp.eq.s32.totalorder %s30, 1
      %p216 = por %p214, %p215
      %p217 = scmp.ne.s32.totalorder %s208, %s209
      %p218 = scmp.eq.s32.totalorder %s30, 0
      %p219 = por %p217, %p218
      %p220 = scmp.ne.s32.totalorder %s208, %s209
      %p221 = scmp.eq.s32.totalorder %s31, 1
      %p222 = por %p220, %p221
      %p224 = scmp.ne.s32.totalorder %s209, %s223
      %p225 = scmp.eq.s32.totalorder %s31, 0
      %p226 = por %p224, %p225
      %s228 = sadd.s32 %s227, 1
      %p231 = scmp.eq.s32.totalorder %s25, 1
      %p232 = scmp.ne.s32.totalorder %s227, %s229
      %p233 = scmp.eq.s32.totalorder %s25, 0
      %p234 = por %p232, %p233
      %p235 = scmp.ne.s32.totalorder %s227, %s229
      %p236 = scmp.eq.s32.totalorder %s30, 1
      %p237 = por %p235, %p236
      %p238 = scmp.ne.s32.totalorder %s229, %s230
      %p239 = scmp.eq.s32.totalorder %s30, 0
      %p240 = por %p238, %p239
      %p241 = scmp.ne.s32.totalorder %s229, %s230
      %p242 = scmp.eq.s32.totalorder %s31, 1
      %p243 = por %p241, %p242
      %p245 = scmp.ne.s32.totalorder %s230, %s244
      %p246 = scmp.eq.s32.totalorder %s31, 0
      %p247 = por %p245, %p246
      %s249 = sadd.s32 %s248, 1
      %p252 = scmp.eq.s32.totalorder %s25, 1
      %p253 = scmp.ne.s32.totalorder %s248, %s250
      %p254 = scmp.eq.s32.totalorder %s25, 0
      %p255 = por %p253, %p254
      %p256 = scmp.ne.s32.totalorder %s248, %s250
      %p257 = scmp.eq.s32.totalorder %s30, 1
      %p258 = por %p256, %p257
      %p259 = scmp.ne.s32.totalorder %s250, %s251
      %p260 = scmp.eq.s32.totalorder %s30, 0
      %p261 = por %p259, %p260
      %p262 = scmp.ne.s32.totalorder %s250, %s251
      %p263 = scmp.eq.s32.totalorder %s31, 1
      %p264 = por %p262, %p263
      %p266 = scmp.ne.s32.totalorder %s251, %s265
      %p267 = scmp.eq.s32.totalorder %s31, 0
      %p268 = por %p266, %p267
      %s269 = ssub.s32 %s25, %s32
      %p270 = scmp.eq.s32.totalorder %s269, 0
      %s272 = sadd.s32 %s271, 1
      %s273 = scalar_select %p270, %s271, %s272
      %p276 = pneg %p270
      %p277 = scmp.eq.s32.totalorder %s25, 1
      %p278 = por %p276, %p277
      %p279 = scmp.ne.s32.totalorder %s271, %s274
      %p280 = scmp.eq.s32.totalorder %s25, 0
      %p281 = por %p279, %p280
      %p282 = scmp.ne.s32.totalorder %s271, %s274
      %p283 = scmp.eq.s32.totalorder %s30, 1
      %p284 = por %p282, %p283
      %p285 = scmp.ne.s32.totalorder %s274, %s275
      %p286 = scmp.eq.s32.totalorder %s30, 0
      %p287 = por %p285, %p286
      %p288 = scmp.ne.s32.totalorder %s274, %s275
      %p289 = scmp.eq.s32.totalorder %s31, 1
      %p290 = por %p288, %p289
      %p292 = scmp.ne.s32.totalorder %s275, %s291
      %p293 = scmp.eq.s32.totalorder %s31, 0
      %p294 = por %p292, %p293
      %p295 = scmp.le.s32.totalorder 1, %s25
      %p296 = scmp.lt.s32.totalorder %s25, 3
      %p297 = pnand %p295, %p296
      %p298 = pneg %p297
      // Predicated region
      $region9: #{tpu_custom_call.1} parent=5 // pred_check
        _
      $region10: #{tpu_custom_call.1} parent=5 // pred_check_branch
        %300 = sbr.rel (%p297) target = $region12
      $region11: #{tpu_custom_call.1} parent=5 // pred_region
        %s301 = ssub.s32 %s25, 1
        // Predicated region
        $region13: #{tpu_custom_call.1} parent=11 // pred_check
          %p302 = pneg %p72
        $region14: #{tpu_custom_call.1} parent=11 // pred_check_branch
          %304 = sbr.rel (%p302) target = $region16
        $region15: #{tpu_custom_call.1} parent=11 // pred_region
          %306 = vsyncadd [#allocation6], 0
          %s307 = sshll.u32 %s1, 4
          %s308 = int_to_ptr.hbm [resolvable:$true] %s307
          %s309 = sshll.u32 [#allocation5], 4
          %s310 = int_to_ptr.vmem [resolvable:$true] %s309
          %315 = dma.hbm_to_vmem [thread:$0]  %s308, 512, %s310, [#allocation6], 128, 128, 8
        $region16: #{tpu_custom_call.1} parent=11 // pred_fallthru
          _
        // Predicated region
        $region17: #{tpu_custom_call.1} parent=11 // pred_check
          %p316 = pneg %p93
        $region18: #{tpu_custom_call.1} parent=11 // pred_check_branch
          %318 = sbr.rel (%p316) target = $region20
        $region19: #{tpu_custom_call.1} parent=11 // pred_region
          %320 = vsyncadd [#allocation6], 0
          %s321 = sshll.u32 %s2, 4
          %s322 = int_to_ptr.hbm [resolvable:$true] %s321
          %s323 = sshll.u32 [#allocation7], 4
          %s324 = int_to_ptr.vmem [resolvable:$true] %s323
          %329 = dma.hbm_to_vmem [thread:$0]  %s322, 512, %s324, [#allocation6], 128, 128, 8
        $region20: #{tpu_custom_call.1} parent=11 // pred_fallthru
          _
        // Predicated region
        $region21: #{tpu_custom_call.1} parent=11 // pred_check
          %p330 = pneg %p114
        $region22: #{tpu_custom_call.1} parent=11 // pred_check_branch
          %332 = sbr.rel (%p330) target = $region24
        $region23: #{tpu_custom_call.1} parent=11 // pred_region
          %334 = vsyncadd [#allocation9], 0
          %s335 = sshll.u32 %s3, 4
          %s336 = int_to_ptr.hbm [resolvable:$true] %s335
          %s337 = sshll.u32 [#allocation8], 4
          %s338 = int_to_ptr.vmem [resolvable:$true] %s337
          %343 = dma.hbm_to_vmem [thread:$0]  %s336, 512, %s338, [#allocation9], 128, 128, 8
        $region24: #{tpu_custom_call.1} parent=11 // pred_fallthru
          _
        // Predicated region
        $region25: #{tpu_custom_call.1} parent=11 // pred_check
          %p344 = pneg %p135
        $region26: #{tpu_custom_call.1} parent=11 // pred_check_branch
          %346 = sbr.rel (%p344) target = $region28
        $region27: #{tpu_custom_call.1} parent=11 // pred_region
          _
        $region28: #{tpu_custom_call.1} parent=11 // pred_fallthru
          _
        // Predicated region
        $region29: #{tpu_custom_call.1} parent=11 // pred_check
          %p347 = pneg %p156
        $region30: #{tpu_custom_call.1} parent=11 // pred_check_branch
          %349 = sbr.rel (%p347) target = $region32
        $region31: #{tpu_custom_call.1} parent=11 // pred_region
          _
        $region32: #{tpu_custom_call.1} parent=11 // pred_fallthru
          _
        // Predicated region
        $region33: #{tpu_custom_call.1} parent=11 // pred_check
          %p350 = pneg %p177
        $region34: #{tpu_custom_call.1} parent=11 // pred_check_branch
          %352 = sbr.rel (%p350) target = $region36
        $region35: #{tpu_custom_call.1} parent=11 // pred_region
          _
        $region36: #{tpu_custom_call.1} parent=11 // pred_fallthru
          _
        // Predicated region
        $region37: #{tpu_custom_call.1} parent=11 // pred_check
          %p353 = pneg %p198
        $region38: #{tpu_custom_call.1} parent=11 // pred_check_branch
          %355 = sbr.rel (%p353) target = $region40
        $region39: #{tpu_custom_call.1} parent=11 // pred_region
          _
        $region40: #{tpu_custom_call.1} parent=11 // pred_fallthru
          _
        // Predicated region
        $region41: #{tpu_custom_call.1} parent=11 // pred_check
          %p356 = pneg %p219
        $region42: #{tpu_custom_call.1} parent=11 // pred_check_branch
          %358 = sbr.rel (%p356) target = $region44
        $region43: #{tpu_custom_call.1} parent=11 // pred_region
          _
        $region44: #{tpu_custom_call.1} parent=11 // pred_fallthru
          _
        // Predicated region
        $region45: #{tpu_custom_call.1} parent=11 // pred_check
          %p359 = pneg %p240
        $region46: #{tpu_custom_call.1} parent=11 // pred_check_branch
          %361 = sbr.rel (%p359) target = $region48
        $region47: #{tpu_custom_call.1} parent=11 // pred_region
          _
        $region48: #{tpu_custom_call.1} parent=11 // pred_fallthru
          _
        // Predicated region
        $region49: #{tpu_custom_call.1} parent=11 // pred_check
          %p362 = pneg %p261
        $region50: #{tpu_custom_call.1} parent=11 // pred_check_branch
          %364 = sbr.rel (%p362) target = $region52
        $region51: #{tpu_custom_call.1} parent=11 // pred_region
          _
        $region52: #{tpu_custom_call.1} parent=11 // pred_fallthru
          _
      $region12: #{tpu_custom_call.1} parent=5 // pred_fallthru
        _
      %p365 = scmp.lt.s32.totalorder %s25, 2
      // Predicated region
      $region53: #{tpu_custom_call.1} parent=5 // pred_check
        %p366 = pneg %p365
      $region54: #{tpu_custom_call.1} parent=5 // pred_check_branch
        %368 = sbr.rel (%p366) target = $region56
      $region55: #{tpu_custom_call.1} parent=5 // pred_region
        // Predicated region
        $region57: #{tpu_custom_call.1} parent=55 // pred_check
          %p369 = pneg %p45
        $region58: #{tpu_custom_call.1} parent=55 // pred_check_branch
          %371 = sbr.rel (%p369) target = $region60
        $region59: #{tpu_custom_call.1} parent=55 // pred_region
          %s372 = sand.u32 %s35, 1
          %s373 = scalar_lea.sflag [#allocation3], %s372
          %s374 = sand.u32 %s35, 1
          %s375 = smul.addr %s374, 8
          %s376 = scalar_lea.vmem [#allocation2], %s375
          %378 = vsyncadd %s373, 0
          %s379 = smul.addr %s25, 8
          %s380 = scalar_lea.hbm %s0, %s379
          %s382 = sshll.u32 %s380, 4
          %s383 = int_to_ptr.hbm [resolvable:$true] %s382
          %s384 = sshll.u32 %s376, 4
          %s385 = int_to_ptr.vmem [resolvable:$true] %s384
          %387 = dma.hbm_to_vmem [thread:$0]  %s383, 128, %s385, %s373
        $region60: #{tpu_custom_call.1} parent=55 // pred_fallthru
          _
      $region56: #{tpu_custom_call.1} parent=5 // pred_fallthru
        _
      %p388 = scmp.le.s32.totalorder 1, %s25
      %p389 = scmp.lt.s32.totalorder %s25, 3
      %p390 = pnand %p388, %p389
      %p391 = pneg %p390
      // Predicated region
      $region61: #{tpu_custom_call.1} parent=5 // pred_check
        _
      $region62: #{tpu_custom_call.1} parent=5 // pred_check_branch
        %393 = sbr.rel (%p390) target = $region64
      $region63: #{tpu_custom_call.1} parent=5 // pred_region
        %s394 = ssub.s32 %s25, 1
        %s395 = sand.u32 %s38, 1
        %s396 = scalar_lea.sflag [#allocation3], %s395
        %s397 = sand.u32 %s38, 1
        %s398 = smul.addr %s397, 8
        %s399 = scalar_lea.vmem [#allocation2], %s398
        // Predicated region
        $region65: #{tpu_custom_call.1} parent=63 // pred_check
          %p400 = pneg %p51
        $region66: #{tpu_custom_call.1} parent=63 // pred_check_branch
          %402 = sbr.rel (%p400) target = $region68
        $region67: #{tpu_custom_call.1} parent=63 // pred_region
          %404 = dma.done %s396, 128
        $region68: #{tpu_custom_call.1} parent=63 // pred_fallthru
          _
        // Predicated region
        $region69: #{tpu_custom_call.1} parent=63 // pred_check
          %p405 = pneg %p72
        $region70: #{tpu_custom_call.1} parent=63 // pred_check_branch
          %407 = sbr.rel (%p405) target = $region72
        $region71: #{tpu_custom_call.1} parent=63 // pred_region
          %409 = dma.done [#allocation6], 512
        $region72: #{tpu_custom_call.1} parent=63 // pred_fallthru
          _
        // Predicated region
        $region73: #{tpu_custom_call.1} parent=63 // pred_check
          %p410 = pneg %p93
        $region74: #{tpu_custom_call.1} parent=63 // pred_check_branch
          %412 = sbr.rel (%p410) target = $region76
        $region75: #{tpu_custom_call.1} parent=63 // pred_region
          %414 = dma.done [#allocation6], 512
        $region76: #{tpu_custom_call.1} parent=63 // pred_fallthru
          _
        // Predicated region
        $region77: #{tpu_custom_call.1} parent=63 // pred_check
          %p415 = pneg %p114
        $region78: #{tpu_custom_call.1} parent=63 // pred_check_branch
          %417 = sbr.rel (%p415) target = $region80
        $region79: #{tpu_custom_call.1} parent=63 // pred_region
          %419 = dma.done [#allocation9], 512
        $region80: #{tpu_custom_call.1} parent=63 // pred_fallthru
          _
        %s420 = sand.u32 %s38, 1
        %s421 = scalar_lea.sflag [#allocation3], %s420
        %s422 = sand.u32 %s38, 1
        %s423 = smul.addr %s422, 8
        %s424 = scalar_lea.vmem [#allocation2], %s423
        %p425 = pneg %p51
        %p426 = pneg %p48
        %p427 = pneg %p72
        %p428 = pneg %p69
        %p429 = pneg %p93
        %p430 = pneg %p90
        %p431 = pneg %p114
        %p432 = pneg %p111
        %p433 = pneg %p135
        %p434 = pneg %p132
        %p435 = pneg %p156
        %p436 = pneg %p153
        %p437 = pneg %p177
        %p438 = pneg %p174
        %p439 = pneg %p198
        %p440 = pneg %p195
        %p441 = pneg %p219
        %p442 = pneg %p216
        %p443 = pneg %p240
        %p444 = pneg %p237
        %p445 = pneg %p261
        %p446 = pneg %p258
        %p447 = pneg %p287
        %p448 = pneg %p284
        %s449 = sand.u32 %s274, 1
        %s450 = scalar_lea.sflag [#allocation4], %s449
        %s451 = sand.u32 %s274, 1
        %s452 = smul.addr %s451, 8
        %s453 = scalar_lea.vmem [#allocation10], %s452
        %v454 = vld [vmem:[%s399] sm:$0xff]
        %vm455 = vcmask 261120
        %v456 = vsel %vm455, %v454, 0.0
        %457 = vadd.xlane.f32.xlu0 %v456
        %v458 = vpop.xlane.xlu0 %457
        %v459 = vrcp.pop 32.0
        %v460 = vmul.f32 32.0, %v459
        %v461 = vsub.f32 1.0, %v460
        %v462 = vmul.f32 %v459, %v461
        %v463 = vadd.f32 %v459, %v462
        %vm464 = vweird.f32 %v459
        %v465 = vsel %vm464, %v459, %v463
        %v466 = vmul.f32 %v458, %v465
        %v467 = vsub.f32 %v454, %v466
        %v468 = vmul.f32 %v467, %v467
        %v469 = vsel %vm455, %v468, 0.0
        %470 = vadd.xlane.f32.xlu0 %v469
        %v471 = vpop.xlane.xlu0 %470
        %v472 = vmul.f32 %v471, %v465
        %v473 = vadd.f32 %v472, 1e-05
        %v474 = vrsqrt.pop %v473
        %v475 = vmul.f32 %v474, %v473
        %v476 = vmul.f32 %v475, %v474
        %v477 = vmul.f32 0.5, %v476
        %v478 = vsub.f32 1.5, %v477
        %v479 = vmul.f32 %v474, %v478
        %vm480 = vweird.f32 %v473
        %vm481 = vweird.f32 %v474
        %vm482 = vmor %vm480, %vm481
        %v483 = vsel %vm482, %v474, %v479
        %v484 = vmul.f32 %v467, %v483
        %v485 = vld [vmem:[%s7] sm:$0x1]
        %v487 = vperm.slane %v485, 0
        %v489 = vmul.f32 %v484, %v487
        %v490 = vld [vmem:[%s8] sm:$0x1]
        %v492 = vperm.slane %v490, 0
        %v494 = vadd.f32 %v489, %v492
        %v495 = vld [vmem:[#allocation5] sm:$0xff]
        %v496 = vld [vmem:[#allocation5 + $0x8] sm:$0xff]
        %v497 = vld [vmem:[#allocation5 + $0x10] sm:$0xff]
        %v498 = vld [vmem:[#allocation5 + $0x18] sm:$0xff]
        %v499 = vld [vmem:[%s4] sm:$0x1]
        %v501 = vperm.slane %v499, 0
        %v504 = vsel %vm455, %v494, 0
        %506 = vmatpush.msra.mxu0 0.0
        %507 = vmatpush.msra.mxu0 0.0
        %508 = vmatpush.msra.mxu0 0.0
        %509 = vmatpush.msra.mxu0 0.0
        %510 = vmatpush.msra.mxu0 0.0
        %511 = vmatpush.msra.mxu0 0.0
        %512 = vmatpush.msra.mxu0 0.0
        %513 = vmatpush.msra.mxu0 0.0
        %514 = vmatpush.msra.mxu0 0.0
        %515 = vmatpush.msra.mxu0 0.0
        %516 = vmatpush.msra.mxu0 0.0
        %517 = vmatpush.msra.mxu0 0.0
        %518 = vmatpush.msra.mxu0 %v498
        %519 = vmatpush.msra.mxu0 %v497
        %520 = vmatpush.msra.mxu0 %v496
        %521 = vmatpush.msra.mxu0 %v495
        %522 = vmatmul.f32.gmra.mxu0 %v504
        %v523 = vpop.f32.mrf.mxu0
        %v524 = vadd.f32 %v501, %v523
        %525 = vdwg.mxu0
        %v526 = vld [vmem:[#allocation7] sm:$0xff]
        %v527 = vld [vmem:[#allocation7 + $0x8] sm:$0xff]
        %v528 = vld [vmem:[#allocation7 + $0x10] sm:$0xff]
        %v529 = vld [vmem:[#allocation7 + $0x18] sm:$0xff]
        %v530 = vld [vmem:[%s5] sm:$0x1]
        %v532 = vperm.slane %v530, 0
        %v535 = vsel %vm455, %v454, 0
        %537 = vmatpush.msra.mxu0 0.0
        %538 = vmatpush.msra.mxu0 0.0
        %539 = vmatpush.msra.mxu0 0.0
        %540 = vmatpush.msra.mxu0 0.0
        %541 = vmatpush.msra.mxu0 0.0
        %542 = vmatpush.msra.mxu0 0.0
        %543 = vmatpush.msra.mxu0 0.0
        %544 = vmatpush.msra.mxu0 0.0
        %545 = vmatpush.msra.mxu0 0.0
        %546 = vmatpush.msra.mxu0 0.0
        %547 = vmatpush.msra.mxu0 0.0
        %548 = vmatpush.msra.mxu0 0.0
        %549 = vmatpush.msra.mxu0 %v529
        %550 = vmatpush.msra.mxu0 %v528
        %551 = vmatpush.msra.mxu0 %v527
        %552 = vmatpush.msra.mxu0 %v526
        %553 = vmatmul.f32.gmra.mxu0 %v535
        %v554 = vpop.f32.mrf.mxu0
        %v555 = vadd.f32 %v532, %v554
        %556 = vdwg.mxu0
        %558 = vrot.lane.b32.xlu0 %v524, 120
        %v559 = vpop.permute.xlu0 %558
        %560 = vrot.lane.b32.xlu0 %v524, 112
        %v561 = vpop.permute.xlu0 %560
        %562 = vrot.lane.b32.xlu0 %v524, 104
        %v563 = vpop.permute.xlu0 %562
        %565 = vrot.lane.b32.xlu0 %v555, 120
        %v566 = vpop.permute.xlu0 %565
        %568 = vrot.lane.b32.xlu0 %v555, 112
        %v569 = vpop.permute.xlu0 %568
        %571 = vrot.lane.b32.xlu0 %v555, 104
        %v572 = vpop.permute.xlu0 %571
        %574 = vrot.lane.b32.xlu0 %v524, 96
        %v575 = vpop.permute.xlu0 %574
        %vm576 = vcmask 64512
        %v577 = vsel %vm576, %v524, 0
        %v579 = vsel %vm576, %v575, 0
        %581 = vmatpush.xpose.msra.mxu0 0.0
        %582 = vmatpush.xpose.msra.mxu0 0.0
        %583 = vmatpush.xpose.msra.mxu0 0.0
        %584 = vmatpush.xpose.msra.mxu0 0.0
        %585 = vmatpush.xpose.msra.mxu0 0.0
        %586 = vmatpush.xpose.msra.mxu0 0.0
        %587 = vmatpush.xpose.msra.mxu0 0.0
        %588 = vmatpush.xpose.msra.mxu0 0.0
        %589 = vmatpush.xpose.msra.mxu0 0.0
        %590 = vmatpush.xpose.msra.mxu0 0.0
        %591 = vmatpush.xpose.msra.mxu0 0.0
        %592 = vmatpush.xpose.msra.mxu0 0.0
        %593 = vmatpush.xpose.msra.mxu0 0.0
        %594 = vmatpush.xpose.msra.mxu0 0.0
        %595 = vmatpush.xpose.msra.mxu0 0.0
        %596 = vmatpush.xpose.msra.mxu0 %v579
        %597 = vmatmul.f32.gmra.mxu0 %v577
        %v598 = vpop.f32.mrf.mxu0
        %v599 = vadd.f32 0.0, %v598
        %600 = vdwg.mxu0
        %601 = vrot.lane.b32.xlu0 %v559, 96
        %v602 = vpop.permute.xlu0 %601
        %v603 = vsel %vm576, %v559, 0
        %v605 = vsel %vm576, %v602, 0
        %607 = vmatpush.xpose.msra.mxu0 0.0
        %608 = vmatpush.xpose.msra.mxu0 0.0
        %609 = vmatpush.xpose.msra.mxu0 0.0
        %610 = vmatpush.xpose.msra.mxu0 0.0
        %611 = vmatpush.xpose.msra.mxu0 0.0
        %612 = vmatpush.xpose.msra.mxu0 0.0
        %613 = vmatpush.xpose.msra.mxu0 0.0
        %614 = vmatpush.xpose.msra.mxu0 0.0
        %615 = vmatpush.xpose.msra.mxu0 0.0
        %616 = vmatpush.xpose.msra.mxu0 0.0
        %617 = vmatpush.xpose.msra.mxu0 0.0
        %618 = vmatpush.xpose.msra.mxu0 0.0
        %619 = vmatpush.xpose.msra.mxu0 0.0
        %620 = vmatpush.xpose.msra.mxu0 0.0
        %621 = vmatpush.xpose.msra.mxu0 0.0
        %622 = vmatpush.xpose.msra.mxu0 %v605
        %623 = vmatmul.f32.gmra.mxu0 %v603
        %v624 = vpop.f32.mrf.mxu0
        %v625 = vadd.f32 0.0, %v624
        %626 = vdwg.mxu0
        %627 = vrot.lane.b32.xlu0 %v561, 96
        %v628 = vpop.permute.xlu0 %627
        %v629 = vsel %vm576, %v561, 0
        %v631 = vsel %vm576, %v628, 0
        %633 = vmatpush.xpose.msra.mxu0 0.0
        %634 = vmatpush.xpose.msra.mxu0 0.0
        %635 = vmatpush.xpose.msra.mxu0 0.0
        %636 = vmatpush.xpose.msra.mxu0 0.0
        %637 = vmatpush.xpose.msra.mxu0 0.0
        %638 = vmatpush.xpose.msra.mxu0 0.0
        %639 = vmatpush.xpose.msra.mxu0 0.0
        %640 = vmatpush.xpose.msra.mxu0 0.0
        %641 = vmatpush.xpose.msra.mxu0 0.0
        %642 = vmatpush.xpose.msra.mxu0 0.0
        %643 = vmatpush.xpose.msra.mxu0 0.0
        %644 = vmatpush.xpose.msra.mxu0 0.0
        %645 = vmatpush.xpose.msra.mxu0 0.0
        %646 = vmatpush.xpose.msra.mxu0 0.0
        %647 = vmatpush.xpose.msra.mxu0 0.0
        %648 = vmatpush.xpose.msra.mxu0 %v631
        %649 = vmatmul.f32.gmra.mxu0 %v629
        %v650 = vpop.f32.mrf.mxu0
        %v651 = vadd.f32 0.0, %v650
        %652 = vdwg.mxu0
        %653 = vrot.lane.b32.xlu0 %v563, 96
        %v654 = vpop.permute.xlu0 %653
        %v655 = vsel %vm576, %v563, 0
        %v657 = vsel %vm576, %v654, 0
        %659 = vmatpush.xpose.msra.mxu0 0.0
        %660 = vmatpush.xpose.msra.mxu0 0.0
        %661 = vmatpush.xpose.msra.mxu0 0.0
        %662 = vmatpush.xpose.msra.mxu0 0.0
        %663 = vmatpush.xpose.msra.mxu0 0.0
        %664 = vmatpush.xpose.msra.mxu0 0.0
        %665 = vmatpush.xpose.msra.mxu0 0.0
        %666 = vmatpush.xpose.msra.mxu0 0.0
        %667 = vmatpush.xpose.msra.mxu0 0.0
        %668 = vmatpush.xpose.msra.mxu0 0.0
        %669 = vmatpush.xpose.msra.mxu0 0.0
        %670 = vmatpush.xpose.msra.mxu0 0.0
        %671 = vmatpush.xpose.msra.mxu0 0.0
        %672 = vmatpush.xpose.msra.mxu0 0.0
        %673 = vmatpush.xpose.msra.mxu0 0.0
        %674 = vmatpush.xpose.msra.mxu0 %v657
        %675 = vmatmul.f32.gmra.mxu0 %v655
        %v676 = vpop.f32.mrf.mxu0
        %v677 = vadd.f32 0.0, %v676
        %678 = vdwg.mxu0
        %v679 = vsel %vm576, %v599, -inf
        %680 = vmax.xlane.f32.xlu0 %v679
        %v681 = vpop.xlane.xlu0 %680
        %v682 = vsel %vm576, %v625, -inf
        %683 = vmax.xlane.f32.xlu0 %v682
        %v684 = vpop.xlane.xlu0 %683
        %v685 = vsel %vm576, %v651, -inf
        %686 = vmax.xlane.f32.xlu0 %v685
        %v687 = vpop.xlane.xlu0 %686
        %v688 = vsel %vm576, %v677, -inf
        %689 = vmax.xlane.f32.xlu0 %v688
        %v690 = vpop.xlane.xlu0 %689
        %v691 = vsub.f32 %v599, %v681
        %v692 = vsub.f32 %v625, %v684
        %v693 = vsub.f32 %v651, %v687
        %v694 = vsub.f32 %v677, %v690
        %v695 = vmul.f32 %v691, 1.442695
        %v696 = vpow.pop %v695
        %v697 = vmul.f32 %v692, 1.442695
        %v698 = vpow.pop %v697
        %v699 = vmul.f32 %v693, 1.442695
        %v700 = vpow.pop %v699
        %v701 = vmul.f32 %v694, 1.442695
        %v702 = vpow.pop %v701
        %v703 = vsel %vm576, %v696, 0.0
        %704 = vadd.xlane.f32.xlu0 %v703
        %v705 = vpop.xlane.xlu0 %704
        %v706 = vsel %vm576, %v698, 0.0
        %707 = vadd.xlane.f32.xlu0 %v706
        %v708 = vpop.xlane.xlu0 %707
        %v709 = vsel %vm576, %v700, 0.0
        %710 = vadd.xlane.f32.xlu0 %v709
        %v711 = vpop.xlane.xlu0 %710
        %v712 = vsel %vm576, %v702, 0.0
        %713 = vadd.xlane.f32.xlu0 %v712
        %v714 = vpop.xlane.xlu0 %713
        %v715 = vrcp.pop %v705
        %v716 = vrcp.pop %v708
        %v717 = vrcp.pop %v711
        %v718 = vrcp.pop %v714
        %v719 = vmul.f32 %v696, %v715
        %v720 = vmul.f32 %v698, %v716
        %v721 = vmul.f32 %v700, %v717
        %v722 = vmul.f32 %v702, %v718
        %v724 = vsel %vm576, %v719, 0
        %726 = vmatpush.msra.mxu0 0.0
        %727 = vmatpush.msra.mxu0 0.0
        %728 = vmatpush.msra.mxu0 0.0
        %729 = vmatpush.msra.mxu0 0.0
        %730 = vmatpush.msra.mxu0 0.0
        %731 = vmatpush.msra.mxu0 0.0
        %732 = vmatpush.msra.mxu0 0.0
        %733 = vmatpush.msra.mxu0 0.0
        %734 = vmatpush.msra.mxu0 0.0
        %735 = vmatpush.msra.mxu0 0.0
        %736 = vmatpush.msra.mxu0 0.0
        %737 = vmatpush.msra.mxu0 0.0
        %738 = vmatpush.msra.mxu0 0.0
        %739 = vmatpush.msra.mxu0 0.0
        %740 = vmatpush.msra.mxu0 0.0
        %741 = vmatpush.msra.mxu0 %v555
        %742 = vmatmul.f32.gmra.mxu0 %v724
        %v743 = vpop.f32.mrf.mxu0
        %v744 = vadd.f32 0.0, %v743
        %745 = vdwg.mxu0
        %v747 = vsel %vm576, %v720, 0
        %749 = vmatpush.msra.mxu0 0.0
        %750 = vmatpush.msra.mxu0 0.0
        %751 = vmatpush.msra.mxu0 0.0
        %752 = vmatpush.msra.mxu0 0.0
        %753 = vmatpush.msra.mxu0 0.0
        %754 = vmatpush.msra.mxu0 0.0
        %755 = vmatpush.msra.mxu0 0.0
        %756 = vmatpush.msra.mxu0 0.0
        %757 = vmatpush.msra.mxu0 0.0
        %758 = vmatpush.msra.mxu0 0.0
        %759 = vmatpush.msra.mxu0 0.0
        %760 = vmatpush.msra.mxu0 0.0
        %761 = vmatpush.msra.mxu0 0.0
        %762 = vmatpush.msra.mxu0 0.0
        %763 = vmatpush.msra.mxu0 0.0
        %764 = vmatpush.msra.mxu0 %v566
        %765 = vmatmul.f32.gmra.mxu0 %v747
        %v766 = vpop.f32.mrf.mxu0
        %v767 = vadd.f32 0.0, %v766
        %768 = vdwg.mxu0
        %v770 = vsel %vm576, %v721, 0
        %772 = vmatpush.msra.mxu0 0.0
        %773 = vmatpush.msra.mxu0 0.0
        %774 = vmatpush.msra.mxu0 0.0
        %775 = vmatpush.msra.mxu0 0.0
        %776 = vmatpush.msra.mxu0 0.0
        %777 = vmatpush.msra.mxu0 0.0
        %778 = vmatpush.msra.mxu0 0.0
        %779 = vmatpush.msra.mxu0 0.0
        %780 = vmatpush.msra.mxu0 0.0
        %781 = vmatpush.msra.mxu0 0.0
        %782 = vmatpush.msra.mxu0 0.0
        %783 = vmatpush.msra.mxu0 0.0
        %784 = vmatpush.msra.mxu0 0.0
        %785 = vmatpush.msra.mxu0 0.0
        %786 = vmatpush.msra.mxu0 0.0
        %787 = vmatpush.msra.mxu0 %v569
        %788 = vmatmul.f32.gmra.mxu0 %v770
        %v789 = vpop.f32.mrf.mxu0
        %v790 = vadd.f32 0.0, %v789
        %791 = vdwg.mxu0
        %v793 = vsel %vm576, %v722, 0
        %795 = vmatpush.msra.mxu0 0.0
        %796 = vmatpush.msra.mxu0 0.0
        %797 = vmatpush.msra.mxu0 0.0
        %798 = vmatpush.msra.mxu0 0.0
        %799 = vmatpush.msra.mxu0 0.0
        %800 = vmatpush.msra.mxu0 0.0
        %801 = vmatpush.msra.mxu0 0.0
        %802 = vmatpush.msra.mxu0 0.0
        %803 = vmatpush.msra.mxu0 0.0
        %804 = vmatpush.msra.mxu0 0.0
        %805 = vmatpush.msra.mxu0 0.0
        %806 = vmatpush.msra.mxu0 0.0
        %807 = vmatpush.msra.mxu0 0.0
        %808 = vmatpush.msra.mxu0 0.0
        %809 = vmatpush.msra.mxu0 0.0
        %810 = vmatpush.msra.mxu0 %v572
        %811 = vmatmul.f32.gmra.mxu0 %v793
        %v812 = vpop.f32.mrf.mxu0
        %v813 = vadd.f32 0.0, %v812
        %814 = vdwg.mxu0
        %816 = vrot.lane.b32.xlu0 %v767, 8
        %v817 = vpop.permute.xlu0 %816
        %820 = vrot.lane.b32.xlu0 %v790, 16
        %v821 = vpop.permute.xlu0 %820
        %824 = vrot.lane.b32.xlu0 %v813, 24
        %v825 = vpop.permute.xlu0 %824
        %v827 = vsel %vm576, %v744, %v817
        %vm828 = vcmask 130048
        %v829 = vsel %vm828, %v827, %v821
        %vm830 = vcmask 195584
        %v831 = vsel %vm830, %v829, %v825
        %v832 = vld [vmem:[#allocation8] sm:$0xff]
        %v833 = vld [vmem:[#allocation8 + $0x8] sm:$0xff]
        %v834 = vld [vmem:[#allocation8 + $0x10] sm:$0xff]
        %v835 = vld [vmem:[#allocation8 + $0x18] sm:$0xff]
        %v837 = vsel %vm455, %v831, 0
        %839 = vmatpush.msra.mxu0 0.0
        %840 = vmatpush.msra.mxu0 0.0
        %841 = vmatpush.msra.mxu0 0.0
        %842 = vmatpush.msra.mxu0 0.0
        %843 = vmatpush.msra.mxu0 0.0
        %844 = vmatpush.msra.mxu0 0.0
        %845 = vmatpush.msra.mxu0 0.0
        %846 = vmatpush.msra.mxu0 0.0
        %847 = vmatpush.msra.mxu0 0.0
        %848 = vmatpush.msra.mxu0 0.0
        %849 = vmatpush.msra.mxu0 0.0
        %850 = vmatpush.msra.mxu0 0.0
        %851 = vmatpush.msra.mxu0 %v835
        %852 = vmatpush.msra.mxu0 %v834
        %853 = vmatpush.msra.mxu0 %v833
        %854 = vmatpush.msra.mxu0 %v832
        %855 = vmatmul.f32.gmra.mxu0 %v837
        %v856 = vpop.f32.mrf.mxu0
        %v857 = vadd.f32 0.0, %v856
        %858 = vdwg.mxu0
        %v859 = vadd.f32 %v454, %v857
        %v860 = vld [vmem:[%s6] sm:$0x1]
        %v862 = vperm.slane %v860, 0
        %v864 = vadd.f32 %v859, %v862
        %v865 = vsel %vm455, %v864, 0.0
        %866 = vadd.xlane.f32.xlu0 %v865
        %v867 = vpop.xlane.xlu0 %866
        %v868 = vmul.f32 %v867, %v465
        %v869 = vsub.f32 %v864, %v868
        %v870 = vmul.f32 %v869, %v869
        %v871 = vsel %vm455, %v870, 0.0
        %872 = vadd.xlane.f32.xlu0 %v871
        %v873 = vpop.xlane.xlu0 %872
        %v874 = vmul.f32 %v873, %v465
        %v875 = vadd.f32 %v874, 1e-05
        %v876 = vrsqrt.pop %v875
        %v877 = vmul.f32 %v876, %v875
        %v878 = vmul.f32 %v877, %v876
        %v879 = vmul.f32 0.5, %v878
        %v880 = vsub.f32 1.5, %v879
        %v881 = vmul.f32 %v876, %v880
        %vm882 = vweird.f32 %v875
        %vm883 = vweird.f32 %v876
        %vm884 = vmor %vm882, %vm883
        %v885 = vsel %vm884, %v876, %v881
        %v886 = vmul.f32 %v869, %v885
        %v887 = vld [vmem:[%s9] sm:$0x1]
        %v889 = vperm.slane %v887, 0
        %v891 = vmul.f32 %v886, %v889
        %v892 = vld [vmem:[%s10] sm:$0x1]
        %v894 = vperm.slane %v892, 0
        %v896 = vadd.f32 %v891, %v894
        %897 = vst.msk [vmem:[%s453] sm:$0xff] %vm455, %v896
        %s898 = sand.u32 %s274, 1
        %s899 = scalar_lea.sflag [#allocation4], %s898
        %s900 = sand.u32 %s274, 1
        %s901 = smul.addr %s900, 8
        %s902 = scalar_lea.vmem [#allocation10], %s901
        // Predicated region
        $region81: #{tpu_custom_call.1} parent=63 // pred_check
          %p903 = pneg %p284
        $region82: #{tpu_custom_call.1} parent=63 // pred_check_branch
          %905 = sbr.rel (%p903) target = $region84
        $region83: #{tpu_custom_call.1} parent=63 // pred_region
          %907 = vsyncadd %s899, 0
          %s908 = smul.addr %s30, 8
          %s909 = scalar_lea.hbm %s11, %s908
          %s911 = sshll.u32 %s902, 4
          %s912 = int_to_ptr.vmem [resolvable:$true] %s911
          %s913 = sshll.u32 %s909, 4
          %s914 = int_to_ptr.hbm [resolvable:$true] %s913
          %916 = dma.vmem_to_hbm [thread:$0]  %s912, 128, %s914, %s899
        $region84: #{tpu_custom_call.1} parent=63 // pred_fallthru
          _
      $region64: #{tpu_custom_call.1} parent=5 // pred_fallthru
        _
      %p917 = scmp.le.s32.totalorder 2, %s25
      // Predicated region
      $region85: #{tpu_custom_call.1} parent=5 // pred_check
        %p918 = pneg %p917
      $region86: #{tpu_custom_call.1} parent=5 // pred_check_branch
        %920 = sbr.rel (%p918) target = $region88
      $region87: #{tpu_custom_call.1} parent=5 // pred_region
        %s921 = ssub.s32 %s25, 2
        // Predicated region
        $region89: #{tpu_custom_call.1} parent=87 // pred_check
          %p922 = pneg %p290
        $region90: #{tpu_custom_call.1} parent=87 // pred_check_branch
          %924 = sbr.rel (%p922) target = $region92
        $region91: #{tpu_custom_call.1} parent=87 // pred_region
          %s925 = sand.u32 %s275, 1
          %s926 = scalar_lea.sflag [#allocation4], %s925
          %s927 = sand.u32 %s275, 1
          %s928 = smul.addr %s927, 8
          %s929 = scalar_lea.vmem [#allocation10], %s928
          %931 = dma.done %s926, 128
        $region92: #{tpu_custom_call.1} parent=87 // pred_fallthru
          _
      $region88: #{tpu_custom_call.1} parent=5 // pred_fallthru
        _
    $region6: #{tpu_custom_call.1} parent=1 // loop_footer
      %s29 = sadd.s32 1, %s25
    $region7: #{tpu_custom_call.1} parent=1 // loop_footer_branch
      %24 = sbr.rel target = $region3
    $region8: #{tpu_custom_call.1} parent=1 // loop_exit
      _
    %932 = vsyncpa [#allocation3], 1
    %s933 = scalar_lea.sflag [#allocation3], 1
    %934 = vsyncpa %s933, 1
    %935 = vsyncpa [#allocation6], 1
    %936 = vsyncpa [#allocation9], 1
    %937 = vsyncpa [#allocation4], 1
    %s938 = scalar_lea.sflag [#allocation4], 1
    %939 = vsyncpa %s938, 1

</llo_original>
